<compile_context>
chip_gen: v5e
topology: v5e:2x2
jax: 0.10.0
libtpu: 0.0.40
codegen_flags: <defaults>
</compile_context>

<pallas_src>
import functools

import numpy as np
import jax
import jax.numpy as jnp
from jax import lax
from jax.experimental import pallas as pl
from jax.experimental.pallas import tpu as pltpu


# ----------------------------------------------------------------------------------
# bool-output probe (cached): writing jnp.bool_ straight from the kernel saves a full
# extra HBM read+write pass versus int8 output + astype outside the kernel.
# ----------------------------------------------------------------------------------
_BOOL_OUT_OK = None


def _bool_out_supported():
    global _BOOL_OUT_OK
    if _BOOL_OUT_OK is None:
        def _probe(o_ref):
            o_ref[...] = lax.broadcasted_iota(jnp.int32, o_ref.shape, 1) < 64
        try:
            r = pl.pallas_call(
                _probe, out_shape=jax.ShapeDtypeStruct((32, 128), jnp.bool_))()
            jax.block_until_ready(r)
            _BOOL_OUT_OK = True
        except Exception:
            _BOOL_OUT_OK = False
    return _BOOL_OUT_OK


def _round_up(x, m):
    return ((x + m - 1) // m) * m


def _pick_tile(padded_dim, candidates):
    for c in candidates:
        if c <= padded_dim and padded_dim % c == 0:
            return c
    return padded_dim


# ----------------------------------------------------------------------------------
# Pallas kernel: tiled rr-mask painter.
#   allowed[q, k] = sel[rid[q], cid[k]]   (id == -1 -> not allowed)
#   then AND with causal rule, OR with pref2pref / con2pref rules.
#   output mask = NOT allowed (True = blocked).
# ----------------------------------------------------------------------------------
def _rr_mask_kernel(num_pref_ref, reg_end_ref,       # scalar-prefetch (SMEM), (B,) each
                    row_allow_ref,                    # (1, TQ, C) bf16: sel[rid[q]] rows
                    col_oh_ref,                       # (1, C, TK) bf16: one-hot of cid[k]
                    out_ref,                          # (1, 1, TQ, TK) bool (or int8)
                    *, causal, pref2pref_mode, con2pref_full):
    b = pl.program_id(0)
    qi = pl.program_id(1)
    ki = pl.program_id(2)
    tq = row_allow_ref.shape[1]
    tk = col_oh_ref.shape[2]

    # Chunk-block gather via one skinny bf16 matmul: (TQ, C) x (C, TK) -> f32.
    # cid == -1 (padding / outside any chunk) produces an all-zero one-hot column.
    allowed = jnp.dot(row_allow_ref[0], col_oh_ref[0],
                      preferred_element_type=jnp.float32) > 0.5                   # (TQ, TK)

    # 1-D position iotas offset by this tile's grid position.  Each rule below is a
    # single per-row column threshold -> one broadcast int compare per rule (no 2-D
    # int32 grids, no mask broadcasts).
    q_pos = qi * tq + lax.broadcasted_iota(jnp.int32, (tq, 1), 0)    # (TQ, 1)
    k_pos = ki * tk + lax.broadcasted_iota(jnp.int32, (1, tk), 1)    # (1, TK)
    n_pref = num_pref_ref[b]
    big = jnp.int32(2 ** 30)
    neg = jnp.int32(-1)

    if causal:
        # blocked iff q >= n_pref and k > q (k >= n_pref is implied) -> keep k <= cap.
        cap = jnp.where(q_pos >= n_pref, q_pos, big)                 # (TQ, 1)
        allowed = allowed & (k_pos <= cap)
    if pref2pref_mode == "full":
        thr = jnp.where(q_pos < n_pref, n_pref, neg)                 # (TQ, 1)
        allowed = allowed | (k_pos < thr)
    elif pref2pref_mode == "lt":
        thr = jnp.where(q_pos < n_pref, q_pos, neg)                  # (TQ, 1)
        allowed = allowed | (k_pos <= thr)
    if con2pref_full:
        r_end = reg_end_ref[b]
        thr = jnp.where((q_pos >= n_pref) & (q_pos < r_end), n_pref, neg)
        allowed = allowed | (k_pos < thr)

    out_ref[0, 0] = jnp.logical_not(allowed).astype(out_ref.dtype)


_TQ_CANDIDATES = (256, 128, 64, 32)          # int8/bool sublane-aligned
_TK_CANDIDATES = (2048, 1024, 512, 256, 128)  # lane-dense stores
# Per-tile VMEM @ (256, 2048): ~0.5 MiB out (x2 buf) + ~2 MiB f32 temp + tiny inputs
# => ~4 MiB, comfortably inside v5e's 16 MiB / v6e-v7x's 32 MiB default scoped VMEM.


def gen_rr_mask_pallas(row_ids, col_ids, selection, num_pref, reg_end, *,
                       causal=False, pref2pref_mode="none", con2pref_full=False):
    """row_ids: (B, Lr) int32, col_ids: (B, Lc) int32, selection: (C, C) bool."""
    B, Lr = row_ids.shape
    Lc = col_ids.shape[1]
    C = int(selection.shape[0])

    Lr_pad = _round_up(max(Lr, 32), 32)
    Lc_pad = _round_up(max(Lc, 128), 128)
    tq = _pick_tile(Lr_pad, _TQ_CANDIDATES)
    tk = _pick_tile(Lc_pad, _TK_CANDIDATES)

    # Precompute sel[rid] rows in plain JAX (tiny: B x Lr_pad x C).  rid == -1 and row
    # padding index the extra all-zero row C ("never allowed").
    sel_ext = jnp.concatenate(
        [jnp.asarray(selection, jnp.bfloat16), jnp.zeros((1, C), jnp.bfloat16)], axis=0)
    rid = jnp.pad(row_ids.astype(jnp.int32), ((0, 0), (0, Lr_pad - Lr)),
                  constant_values=-1)
    row_allow = sel_ext[jnp.where(rid < 0, C, rid)]                    # (B, Lr_pad, C)

    # Precompute column one-hot table once (B x C x Lc_pad bf16); cid == -1 -> all-zero.
    cid = jnp.pad(col_ids.astype(jnp.int32), ((0, 0), (0, Lc_pad - Lc)),
                  constant_values=-1)
    col_onehot = (cid[:, None, :] ==
                  jnp.arange(C, dtype=jnp.int32)[None, :, None]).astype(jnp.bfloat16)

    out_dtype = jnp.bool_ if _bool_out_supported() else jnp.int8

    kernel = functools.partial(_rr_mask_kernel, causal=causal,
                               pref2pref_mode=pref2pref_mode,
                               con2pref_full=con2pref_full)

    out = pl.pallas_call(
        kernel,
        out_shape=jax.ShapeDtypeStruct((B, 1, Lr_pad, Lc_pad), out_dtype),
        grid_spec=pltpu.PrefetchScalarGridSpec(
            num_scalar_prefetch=2,               # num_pref, reg_end land in SMEM
            grid=(B, Lr_pad // tq, Lc_pad // tk),
            in_specs=[
                pl.BlockSpec((1, tq, C), lambda b, qi, ki, np_r, re_r: (b, qi, 0)),
                pl.BlockSpec((1, C, tk), lambda b, qi, ki, np_r, re_r: (b, 0, ki)),
            ],
            out_specs=pl.BlockSpec((1, 1, tq, tk),
                                   lambda b, qi, ki, np_r, re_r: (b, 0, qi, ki)),
        ),
        compiler_params=pltpu.CompilerParams(
            dimension_semantics=("parallel", "parallel", "parallel")),
    )(jnp.asarray(num_pref, jnp.int32), jnp.asarray(reg_end, jnp.int32),
      row_allow, col_onehot)

    if out_dtype != jnp.bool_:
        out = out.astype(jnp.bool_)      # fallback path only (costs one extra HBM pass)
    if Lr_pad != Lr or Lc_pad != Lc:
        out = out[:, :, :Lr, :Lc]
    return out


# ----------------------------------------------------------------------------------
# Plain-JAX painter for the tiny summary masks (ss / sr / rs): a few KB each, so one
# vectorized gather is cheaper than extra pallas_call dispatches.
# ----------------------------------------------------------------------------------
def _gather_block_mask(row_ids, col_ids, selection):
    C = selection.shape[0]
    sel_ext = jnp.pad(jnp.asarray(selection, jnp.bool_), ((0, 1), (0, 1)))
    r = jnp.where(row_ids < 0, C, row_ids).astype(jnp.int32)
    c = jnp.where(col_ids < 0, C, col_ids).astype(jnp.int32)
    allowed = sel_ext[r[:, :, None], c[:, None, :]]      # (B, Lr, Lc) bool
    return jnp.logical_not(allowed)[:, None, :, :]       # (B, 1, Lr, Lc)


# ----------------------------------------------------------------------------------
# Glue: selection matrices from the attention scheme, chunk-id lookup tables.
# ----------------------------------------------------------------------------------
def build_selection(n, mode, self_mode):
    """Block-selection matrix sel[i, j] = chunk i may attend chunk j (bool numpy).
    mode: 'all'/'full', 'none', or a tuple of relative chunk offsets (j - i)."""
    i = np.arange(n)[:, None]
    j = np.arange(n)[None, :]
    if mode in ("all", "full"):
        s = np.ones((n, n), bool)
    elif mode in ("none", None):
        s = np.zeros((n, n), bool)
    else:
        s = np.zeros((n, n), bool)
        for off in mode:
            s |= (j - i) == off
    eye = i == j
    if self_mode == "none":
        s = s & ~eye
    elif self_mode == "full":
        s = s | eye
    elif self_mode != "default":
        raise ValueError(self_mode)
    return s


def compute_reg_chunk_ids(reg_chunk_ranges, chunk_limit, reg_len):
    """(B, reg_len) int32: chunk index of each regular position (-1 if none / beyond limit)."""
    B, Cmax, _ = reg_chunk_ranges.shape
    pos = jnp.arange(reg_len, dtype=jnp.int32)
    starts = reg_chunk_ranges[:, :, 0].astype(jnp.int32)
    ends = reg_chunk_ranges[:, :, 1].astype(jnp.int32)
    valid = jnp.arange(Cmax, dtype=jnp.int32)[None, :] < chunk_limit[:, None]
    inr = ((pos[None, :, None] >= starts[:, None, :])
           & (pos[None, :, None] < ends[:, None, :])
           & valid[:, None, :])                       # (B, L, Cmax)
    has = jnp.any(inr, axis=-1)
    idx = jnp.argmax(inr, axis=-1).astype(jnp.int32)
    return jnp.where(has, idx, -1).astype(jnp.int32)


def compute_sum_chunk_ids(num_complete_chunks, num_summary, sum_len):
    """(B, sum_len) int32: chunk index owning each summary position (-1 if none)."""
    pos = jnp.arange(sum_len, dtype=jnp.int32)
    cid = pos // num_summary
    valid = cid[None, :] < num_complete_chunks[:, None]
    return jnp.where(valid, cid[None, :], -1).astype(jnp.int32)


# ----------------------------------------------------------------------------------
# Module port.
# ----------------------------------------------------------------------------------
class LayerAttentionMaskGenerationPallas:
    def __init__(self, scheme, gen_parts=None, single_head=True):
        self.scheme = scheme
        self.gen_parts = gen_parts
        self.single_head = single_head
        self.num_fake_heads = 1
        assert scheme["pref2pref_mode"] in ("full", "lt", "none")
        assert scheme["sum2pref_mode"] == "none"
        assert scheme["pref2sum_mode"] == "none"
        assert scheme["con2pref_mode"] == "full"
        assert scheme["pref2con_mode"] == "none"

    def __call__(self, reg_chunk_ranges, num_chunks, num_complete_chunks,
                 num_summary, num_pref, sum_len, reg_len):
        sch = self.scheme
        reg_chunk_ranges = jnp.asarray(reg_chunk_ranges, jnp.int32)
        num_chunks = jnp.asarray(num_chunks, jnp.int32)
        num_complete_chunks = jnp.asarray(num_complete_chunks, jnp.int32)
        num_pref = jnp.asarray(num_pref, jnp.int32)
        B, Cmax, _ = reg_chunk_ranges.shape

        # Block-selection matrices (tiny, scheme-defined; stationary in chunk offset).
        sel_cc = build_selection(
            Cmax, sch["con2con"],
            "full" if sch["con2con_self"] == "lt" else sch["con2con_self"])
        sel_cs = build_selection(Cmax, sch["con2sum"], sch["con2sum_self"])
        sel_sc = build_selection(Cmax, sch["sum2con"], sch["sum2con_self"])
        sel_ss = build_selection(Cmax, sch["sum2sum"], sch["sum2sum_self"])

        rid_reg_nc = compute_reg_chunk_ids(reg_chunk_ranges, num_chunks, reg_len)
        rid_reg_comp = compute_reg_chunk_ids(reg_chunk_ranges, num_complete_chunks, reg_len)

        last_idx = jnp.maximum(num_chunks - 1, 0)
        reg_end = jnp.where(
            num_chunks > 0,
            jnp.take_along_axis(reg_chunk_ranges[:, :, 1], last_idx[:, None], axis=1)[:, 0],
            0).astype(jnp.int32)

        ss_mask = sr_mask = rs_mask = None
        if sum_len > 0 and num_summary > 0:
            rid_sum = compute_sum_chunk_ids(num_complete_chunks, num_summary, sum_len)
            ss_mask = _gather_block_mask(rid_sum, rid_sum, sel_ss)
            sr_mask = _gather_block_mask(rid_sum, rid_reg_comp, sel_sc)
            rs_mask = _gather_block_mask(rid_reg_nc, rid_sum, sel_cs)
        # TODO(synk): sum_len > 0 with num_summary <= 0 is ill-defined in the reference too.

        rr_mask = gen_rr_mask_pallas(
            rid_reg_nc, rid_reg_nc, sel_cc, num_pref, reg_end,
            causal=sch["con2con_causal"],
            pref2pref_mode=sch["pref2pref_mode"],
            con2pref_full=(sch["con2pref_mode"] == "full"))

        attn_mask = {"ss": ss_mask, "sr": sr_mask, "rs": rs_mask, "rr": rr_mask}
        if self.gen_parts is not None:
            for key in ("ss", "sr", "rs", "rr"):
                if key not in self.gen_parts:
                    attn_mask.pop(key)
        return attn_mask


# ----------------------------------------------------------------------------------
# Pure-numpy reference (direct transcription of the PyTorch forward) for verification.
# ----------------------------------------------------------------------------------
def reference_masks(reg_chunk_ranges, num_chunks, num_complete_chunks,
                    num_summary, num_pref, sum_len, reg_len, scheme):
    rcr = np.asarray(reg_chunk_ranges)
    nc_arr = np.asarray(num_chunks)
    comp_arr = np.asarray(num_complete_chunks)
    npref_arr = np.asarray(num_pref)
    B = rcr.shape[0]
    ns = num_summary
    max_comp = int(comp_arr.max())

    def sel_mat(n, mode, self_mode):
        return build_selection(n, mode, self_mode)

    ss = None
    if sum_len > 0 and ns > 0:
        temp = max_comp * ns
        base = ~sel_mat(max_comp, scheme["sum2sum"], scheme["sum2sum_self"])
        ss = np.ones((B, 1, sum_len, sum_len), bool)
        for b in range(B):
            mb = base.copy()
            comp = int(comp_arr[b])
            mb[comp:, :] = True
            mb[:, comp:] = True
            ss[b, 0, :temp, :temp] = np.repeat(np.repeat(mb, ns, 0), ns, 1)

    sr = None
    if sum_len > 0:
        sr = np.ones((B, 1, sum_len, reg_len), bool)
        for b in range(B):
            comp = int(comp_arr[b])
            if comp <= 0:
                continue
            s = sel_mat(comp, scheme["sum2con"], scheme["sum2con_self"])
            for i in range(comp):
                for j in range(comp):
                    if s[i, j]:
                        c0, c1 = int(rcr[b, j, 0]), int(rcr[b, j, 1])
                        sr[b, 0, i * ns:(i + 1) * ns, c0:c1] = False

    rs = None
    if sum_len > 0:
        rs = np.ones((B, 1, reg_len, sum_len), bool)
        for b in range(B):
            nch, comp = int(nc_arr[b]), int(comp_arr[b])
            if nch <= 0:
                continue
            s = sel_mat(nch, scheme["con2sum"], scheme["con2sum_self"])[:, :comp]
            for i in range(nch):
                for j in range(comp):
                    if s[i, j]:
                        r0, r1 = int(rcr[b, i, 0]), int(rcr[b, i, 1])
                        rs[b, 0, r0:r1, j * ns:(j + 1) * ns] = False

    rr = np.ones((B, 1, reg_len, reg_len), bool)
    cc_self = "full" if scheme["con2con_self"] == "lt" else scheme["con2con_self"]
    for b in range(B):
        nch, npref = int(nc_arr[b]), int(npref_arr[b])
        if nch > 0:
            s = sel_mat(nch, scheme["con2con"], cc_self)
            for i in range(nch):
                for j in range(nch):
                    if s[i, j]:
                        r0, r1 = int(rcr[b, i, 0]), int(rcr[b, i, 1])
                        c0, c1 = int(rcr[b, j, 0]), int(rcr[b, j, 1])
                        rr[b, 0, r0:r1, c0:c1] = False
            if scheme["con2con_causal"]:
                L = reg_len - npref
                tri = np.triu(np.ones((L, L), bool), 1)
                blk = rr[b, 0, npref:, npref:].copy()
                blk[tri] = True
                rr[b, 0, npref:, npref:] = blk
        if scheme["pref2pref_mode"] == "full":
            rr[b, 0, :npref, :npref] = False
        elif scheme["pref2pref_mode"] == "lt":
            if npref == 1:
                rr[b, 0, :1, :1] = False
            else:
                rr[b, 0, :npref, :npref] = np.triu(rr[b, 0, :npref, :npref], 1)
        if scheme["con2pref_mode"] == "full" and nch > 0:
            r_end = int(rcr[b, nch - 1, 1])
            rr[b, 0, npref:r_end, :npref] = False
    return {"ss": ss, "sr": sr, "rs": rs, "rr": rr}


# ----------------------------------------------------------------------------------
if __name__ == "__main__":
    key = jax.random.PRNGKey(0)

    # Small, deterministic synthetic inputs consistent with the module's forward().
    B = 2
    Cmax = 5                       # max number of chunks (bars) per sample
    num_summary = 2                # summary tokens per complete chunk
    num_pref_np = np.array([2, 1], dtype=np.int32)
    num_chunks_np = np.array([5, 3], dtype=np.int32)
    num_complete_np = np.array([4, 3], dtype=np.int32)

    chunk_lens = np.asarray(jax.random.randint(key, (B, Cmax), 4, 9))  # lengths in [4, 8]
    rcr = np.zeros((B, Cmax, 2), dtype=np.int32)
    for b in range(B):
        start = int(num_pref_np[b])
        for c in range(int(num_chunks_np[b])):
            end = start + int(chunk_lens[b, c])
            rcr[b, c] = (start, end)
            start = end

    reg_len = 48
    sum_len = int(num_complete_np.max()) * num_summary + 2 * num_summary  # 12

    # Deterministic "parameters": the single-head layer attention scheme.
    scheme = dict(
        con2con=(-2, -1), con2con_self="lt", con2con_causal=True,
        con2sum=(-2, -1), con2sum_self="none",
        sum2con=(0,), sum2con_self="full",
        sum2sum=(-1, 0), sum2sum_self="none",
        pref2pref_mode="full", con2pref_mode="full",
        sum2pref_mode="none", pref2sum_mode="none", pref2con_mode="none",
    )

    gen = LayerAttentionMaskGenerationPallas(scheme, gen_parts=None, single_head=True)
    masks = gen(jnp.asarray(rcr), jnp.asarray(num_chunks_np), jnp.asarray(num_complete_np),
                num_summary, jnp.asarray(num_pref_np), sum_len, reg_len)
    for v in masks.values():
        if v is not None:
            jax.block_until_ready(v)

    ref = reference_masks(rcr, num_chunks_np, num_complete_np,
                          num_summary, num_pref_np, sum_len, reg_len, scheme)
    for k in ("ss", "sr", "rs", "rr"):
        got = np.asarray(masks[k])
        exp = ref[k]
        assert got.dtype == np.bool_, (k, got.dtype)
        assert got.shape == exp.shape, (k, got.shape, exp.shape)
        assert np.array_equal(got, exp), f"mismatch in {k} mask"

    print("KERNEL_OK")
</pallas_src>

<mosaic_0001>
module attributes {stable_mosaic.version = 11 : i64} {
  func.func @_rr_mask_kernel(%arg0: i32, %arg1: i32, %arg2: i32, %arg3: memref<2xi32, #tpu.memory_space<smem>>, %arg4: memref<2xi32, #tpu.memory_space<smem>>, %arg5: memref<1x64x5xbf16, #tpu.memory_space<vmem>>, %arg6: memref<1x5x128xbf16, #tpu.memory_space<vmem>>, %arg7: memref<1x1x64x128xi8, #tpu.memory_space<vmem>>) attributes {dimension_semantics = [#tpu.dimension_semantics<parallel>, #tpu.dimension_semantics<parallel>, #tpu.dimension_semantics<parallel>], iteration_bounds = array<i64: 2, 1, 1>, scalar_prefetch = 2 : i64, scratch_operands = 0 : i64, tpu.core_type = #tpu.core_type<tc>, window_params = [{transform_indices = @transform_0, window_bounds = array<i64: 1, 64, 5>}, {transform_indices = @transform_1, window_bounds = array<i64: 1, 5, 128>}, {transform_indices = @transform_2, window_bounds = array<i64: 1, 1, 64, 128>}]} {
    %c0 = arith.constant 0 : index
    %c0_0 = arith.constant 0 : index
    %c0_1 = arith.constant 0 : index
    %0 = vector.load %arg5[%c0, %c0_0, %c0_1] : memref<1x64x5xbf16, #tpu.memory_space<vmem>>, vector<1x64x5xbf16>
    %1 = vector.shape_cast %0 : vector<1x64x5xbf16> to vector<64x5xbf16>
    %c0_2 = arith.constant 0 : index
    %c0_3 = arith.constant 0 : index
    %c0_4 = arith.constant 0 : index
    %2 = vector.load %arg6[%c0_2, %c0_3, %c0_4] : memref<1x5x128xbf16, #tpu.memory_space<vmem>>, vector<1x5x128xbf16>
    %3 = vector.shape_cast %2 : vector<1x5x128xbf16> to vector<5x128xbf16>
    %cst = arith.constant dense<0.000000e+00> : vector<64x128xf32>
    %4 = tpu.matmul %1, %3, %cst {dimension_numbers = #tpu.dot_dimension_numbers<[1], [0], [0], [1], [0, 0, 1, 1], [], []>} : vector<64x5xbf16>, vector<5x128xbf16>, vector<64x128xf32> -> vector<64x128xf32>
    %cst_5 = arith.constant 5.000000e-01 : f32
    %5 = vector.broadcast %cst_5 : f32 to vector<64x128xf32>
    %6 = arith.cmpf ogt, %4, %5 : vector<64x128xf32>
    %c64_i32 = arith.constant 64 : i32
    %7 = arith.muli %arg1, %c64_i32 : i32
    %8 = tpu.iota {dimensions = array<i32: 0>} : vector<64x1xi32>
    %9 = vector.broadcast %7 : i32 to vector<64x1xi32>
    %10 = arith.addi %9, %8 : vector<64x1xi32>
    %c128_i32 = arith.constant 128 : i32
    %11 = arith.muli %arg2, %c128_i32 : i32
    %12 = tpu.iota {dimensions = array<i32: 1>} : vector<1x128xi32>
    %13 = vector.broadcast %11 : i32 to vector<1x128xi32>
    %14 = arith.addi %13, %12 : vector<1x128xi32>
    %15 = arith.index_cast %arg0 : i32 to index
    %16 = memref.load %arg3[%15] : memref<2xi32, #tpu.memory_space<smem>>
    %17 = vector.broadcast %16 : i32 to vector<64x1xi32>
    %18 = arith.cmpi sge, %10, %17 : vector<64x1xi32>
    %c1073741824_i32 = arith.constant 1073741824 : i32
    %19 = vector.broadcast %c1073741824_i32 : i32 to vector<64x1xi32>
    %20 = arith.select %18, %10, %19 : vector<64x1xi1>, vector<64x1xi32>
    %21 = vector.broadcast %14 : vector<1x128xi32> to vector<64x128xi32>
    %22 = vector.broadcast %20 : vector<64x1xi32> to vector<64x128xi32>
    %23 = arith.cmpi sle, %21, %22 : vector<64x128xi32>
    %24 = arith.andi %6, %23 : vector<64x128xi1>
    %25 = vector.broadcast %16 : i32 to vector<64x1xi32>
    %26 = arith.cmpi slt, %10, %25 : vector<64x1xi32>
    %c-1_i32 = arith.constant -1 : i32
    %27 = vector.broadcast %16 : i32 to vector<64x1xi32>
    %28 = vector.broadcast %c-1_i32 : i32 to vector<64x1xi32>
    %29 = arith.select %26, %27, %28 : vector<64x1xi1>, vector<64x1xi32>
    %30 = vector.broadcast %14 : vector<1x128xi32> to vector<64x128xi32>
    %31 = vector.broadcast %29 : vector<64x1xi32> to vector<64x128xi32>
    %32 = arith.cmpi slt, %30, %31 : vector<64x128xi32>
    %33 = arith.ori %24, %32 : vector<64x128xi1>
    %34 = arith.index_cast %arg0 : i32 to index
    %35 = memref.load %arg4[%34] : memref<2xi32, #tpu.memory_space<smem>>
    %36 = vector.broadcast %16 : i32 to vector<64x1xi32>
    %37 = arith.cmpi sge, %10, %36 : vector<64x1xi32>
    %38 = vector.broadcast %35 : i32 to vector<64x1xi32>
    %39 = arith.cmpi slt, %10, %38 : vector<64x1xi32>
    %40 = arith.andi %37, %39 : vector<64x1xi1>
    %c-1_i32_6 = arith.constant -1 : i32
    %41 = vector.broadcast %16 : i32 to vector<64x1xi32>
    %42 = vector.broadcast %c-1_i32_6 : i32 to vector<64x1xi32>
    %43 = arith.select %40, %41, %42 : vector<64x1xi1>, vector<64x1xi32>
    %44 = vector.broadcast %14 : vector<1x128xi32> to vector<64x128xi32>
    %45 = vector.broadcast %43 : vector<64x1xi32> to vector<64x128xi32>
    %46 = arith.cmpi slt, %44, %45 : vector<64x128xi32>
    %47 = arith.ori %33, %46 : vector<64x128xi1>
    %cst_7 = arith.constant dense<true> : vector<64x128xi1>
    %48 = arith.xori %47, %cst_7 : vector<64x128xi1>
    %49 = arith.extui %48 : vector<64x128xi1> to vector<64x128xi8>
    %c0_8 = arith.constant 0 : index
    %c0_9 = arith.constant 0 : index
    %c0_10 = arith.constant 0 : index
    %c0_11 = arith.constant 0 : index
    %50 = vector.load %arg7[%c0_8, %c0_9, %c0_10, %c0_11] : memref<1x1x64x128xi8, #tpu.memory_space<vmem>>, vector<1x1x64x128xi8>
    %51 = vector.shape_cast %50 : vector<1x1x64x128xi8> to vector<64x128xi8>
    %52 = vector.shape_cast %49 : vector<64x128xi8> to vector<1x1x64x128xi8>
    tpu.vector_store %arg7[%c0_8, %c0_9, %c0_10, %c0_11], %52 {strides = array<i32>} : memref<1x1x64x128xi8, #tpu.memory_space<vmem>>, vector<1x1x64x128xi8>,
    return
  }
  func.func @transform_0(%arg0: i32, %arg1: i32, %arg2: i32, %arg3: memref<2xi32, #tpu.memory_space<smem>>, %arg4: memref<2xi32, #tpu.memory_space<smem>>) -> (i32, i32, i32) {
    %c0_i32 = arith.constant 0 : i32
    %c0_i32_0 = arith.constant 0 : i32
    return %arg0, %arg1, %c0_i32 : i32, i32, i32
  }
  func.func @transform_1(%arg0: i32, %arg1: i32, %arg2: i32, %arg3: memref<2xi32, #tpu.memory_space<smem>>, %arg4: memref<2xi32, #tpu.memory_space<smem>>) -> (i32, i32, i32) {
    %c0_i32 = arith.constant 0 : i32
    %c0_i32_0 = arith.constant 0 : i32
    return %arg0, %c0_i32, %arg2 : i32, i32, i32
  }
  func.func @transform_2(%arg0: i32, %arg1: i32, %arg2: i32, %arg3: memref<2xi32, #tpu.memory_space<smem>>, %arg4: memref<2xi32, #tpu.memory_space<smem>>) -> (i32, i32, i32, i32) {
    %c0_i32 = arith.constant 0 : i32
    %c0_i32_0 = arith.constant 0 : i32
    return %arg0, %c0_i32, %arg1, %arg2 : i32, i32, i32, i32
  }
}

</mosaic_0001>

<llo_original>
// kernel: tpu_custom_call.1
$region0: #{tpu_custom_call.1}
  #allocation0 [shape = 'u32[]', space=smem, size = 0x4, offset = 0x4, fixed_abs, tag = 'smem constant byte address 0x4 - core index']
  #allocation1 [shape = 'u32[72,128]{1,0:T(1,128)}', space=vmem, size = 0x9000, scoped, tag = 'internal scratch']
  #allocation2 [shape = 's32[1]{0}', space=sflag, size = 0x4, scoped, tag = 'scoped memory for tpu_custom_call.1']
  #allocation3 [shape = 'u8[512]{0}', space=smem, size = 0x200, scoped, tag = 'prefetched SMEM operand 0']
  #allocation4 [shape = 'u8[512]{0}', space=smem, size = 0x200, scoped, tag = 'prefetched SMEM operand 1']
  %s0 = inlined_call_operand.vmem [shape: s32[2], index: 0, kind: input, shape index: {}]
  %s1 = inlined_call_operand.vmem [shape: s32[2], index: 1, kind: input, shape index: {}]
  %s2 = inlined_call_operand.vmem [shape: bf16[2,64,5], index: 2, kind: input, shape index: {}]
  %s3 = inlined_call_operand.vmem [shape: bf16[2,5,128], index: 3, kind: input, shape index: {}]
  %s4 = inlined_call_operand.hbm [shape: s8[2,1,64,128], index: 4, kind: output, shape index: {}]
  %s5 = sld [smem:[#allocation0]]
  $region41: #{tpu_custom_call.1} parent=0
    _
  %s7 = ssub.s32 1, %s5
  %s8 = scalar_select 0, %s7, %s5
  %s10 = sshll.u32 %s0, 4
  %s11 = int_to_ptr.vmem [resolvable:$true] %s10
  %13 = dma.vmem_to_smem %s11, 16, [#allocation3], [#allocation2]
  %s15 = sshll.u32 %s1, 4
  %s16 = int_to_ptr.vmem [resolvable:$true] %s15
  %18 = dma.vmem_to_smem %s16, 16, [#allocation4], [#allocation2]
  %20 = dma.done [#allocation2], 32
  %21 = sfence
  $region1: #{tpu_custom_call.1} parent=0
    #allocation5 [shape = 'u8[16384]{0}', space=vmem, size = 0x4000, scoped, tag = 'output window, operand 0']
    #allocation6 [shape = 's32[2]{0}', space=sflag, size = 0x8, scoped, tag = 'scoped memory for tpu_custom_call.1']
    %22 = vsyncpa [#allocation6], 0
    %s23 = scalar_lea.sflag [#allocation6], 1
    %24 = vsyncpa %s23, 0
    loop: start=0, step=1, limit=4
    $region2: #{tpu_custom_call.1} parent=1 // loop_pre_header
      _
    $region3: #{tpu_custom_call.1} parent=1 // loop_header
      %s26 = sphi 0, %s30
      %p27 = scmp.ge.s32.totalorder %s26, 4
      %s33 = sphi 0, %s52
      %s34 = sphi 0, %s48
      %s35 = sphi 0, %s44
      %s36 = sphi 0, %s33
      %s37 = sphi 0, %s34
      %s38 = sphi 0, %s35
      %s39 = sphi 0, %s36
      %s40 = sphi 0, %s37
      %s41 = sphi 0, %s38
      %s57 = sphi 0, %s59
      %s60 = sphi 0, %s57
      %s61 = sphi 0, %s60
      %s77 = sphi 0, %s61
      %s85 = sphi 0, %s87
      %s88 = sphi 0, %s85
      %s89 = sphi 0, %s88
      %s105 = sphi 0, %s89
      %s115 = sphi 0, %s117
      %s118 = sphi 0, %s115
      %s119 = sphi 0, %s118
      %s135 = sphi 0, %s119
    $region4: #{tpu_custom_call.1} parent=1 // loop_header_branch
      %29 = sbr.rel (%p27) target = $region8
    $region5: #{tpu_custom_call.1} parent=1 // loop_body
      %s31 = ssub.s32 %s26, 1
      %s32 = ssub.s32 %s26, 2
      %s42 = sadd.s32 1, %s35
      %p43 = scmp.ge.s32.totalorder %s42, 1
      %s44 = scalar_select %p43, 0, %s42
      %s45 = sadd.s32 1, %s34
      %s46 = scalar_select %p43, %s45, %s34
      %p47 = scmp.ge.s32.totalorder %s46, 1
      %s48 = scalar_select %p47, 0, %s46
      %s49 = sadd.s32 1, %s33
      %s50 = scalar_select %p47, %s49, %s33
      %p51 = scmp.ge.s32.totalorder %s50, 2
      %s52 = scalar_select %p51, 0, %s50
      %s53 = ssub.s32 %s33, %s52
      %s54 = ssub.s32 %s34, %s48
      %s55 = sor.u32 %s53, %s54
      %p56 = scmp.eq.s32.totalorder %s55, 0
      %s58 = sadd.s32 %s57, 1
      %s59 = scalar_select %p56, %s57, %s58
      %p62 = pneg %p56
      %p63 = scmp.eq.s32.totalorder %s26, 1
      %p64 = por %p62, %p63
      %p65 = scmp.ne.s32.totalorder %s57, %s60
      %p66 = scmp.eq.s32.totalorder %s26, 0
      %p67 = por %p65, %p66
      %p68 = scmp.ne.s32.totalorder %s57, %s60
      %p69 = scmp.eq.s32.totalorder %s31, 1
      %p70 = por %p68, %p69
      %p71 = scmp.ne.s32.totalorder %s60, %s61
      %p72 = scmp.eq.s32.totalorder %s31, 0
      %p73 = por %p71, %p72
      %p74 = scmp.ne.s32.totalorder %s60, %s61
      %p75 = scmp.eq.s32.totalorder %s32, 1
      %p76 = por %p74, %p75
      %p78 = scmp.ne.s32.totalorder %s61, %s77
      %p79 = scmp.eq.s32.totalorder %s32, 0
      %p80 = por %p78, %p79
      %s81 = ssub.s32 %s33, %s52
      %s82 = ssub.s32 %s35, %s44
      %s83 = sor.u32 %s81, %s82
      %p84 = scmp.eq.s32.totalorder %s83, 0
      %s86 = sadd.s32 %s85, 1
      %s87 = scalar_select %p84, %s85, %s86
      %p90 = pneg %p84
      %p91 = scmp.eq.s32.totalorder %s26, 1
      %p92 = por %p90, %p91
      %p93 = scmp.ne.s32.totalorder %s85, %s88
      %p94 = scmp.eq.s32.totalorder %s26, 0
      %p95 = por %p93, %p94
      %p96 = scmp.ne.s32.totalorder %s85, %s88
      %p97 = scmp.eq.s32.totalorder %s31, 1
      %p98 = por %p96, %p97
      %p99 = scmp.ne.s32.totalorder %s88, %s89
      %p100 = scmp.eq.s32.totalorder %s31, 0
      %p101 = por %p99, %p100
      %p102 = scmp.ne.s32.totalorder %s88, %s89
      %p103 = scmp.eq.s32.totalorder %s32, 1
      %p104 = por %p102, %p103
      %p106 = scmp.ne.s32.totalorder %s89, %s105
      %p107 = scmp.eq.s32.totalorder %s32, 0
      %p108 = por %p106, %p107
      %s109 = ssub.s32 %s33, %s52
      %s110 = ssub.s32 %s34, %s48
      %s111 = sor.u32 %s109, %s110
      %s112 = ssub.s32 %s35, %s44
      %s113 = sor.u32 %s111, %s112
      %p114 = scmp.eq.s32.totalorder %s113, 0
      %s116 = sadd.s32 %s115, 1
      %s117 = scalar_select %p114, %s115, %s116
      %p120 = pneg %p114
      %p121 = scmp.eq.s32.totalorder %s26, 1
      %p122 = por %p120, %p121
      %p123 = scmp.ne.s32.totalorder %s115, %s118
      %p124 = scmp.eq.s32.totalorder %s26, 0
      %p125 = por %p123, %p124
      %p126 = scmp.ne.s32.totalorder %s115, %s118
      %p127 = scmp.eq.s32.totalorder %s31, 1
      %p128 = por %p126, %p127
      %p129 = scmp.ne.s32.totalorder %s118, %s119
      %p130 = scmp.eq.s32.totalorder %s31, 0
      %p131 = por %p129, %p130
      %p132 = scmp.ne.s32.totalorder %s118, %s119
      %p133 = scmp.eq.s32.totalorder %s32, 1
      %p134 = por %p132, %p133
      %p136 = scmp.ne.s32.totalorder %s119, %s135
      %p137 = scmp.eq.s32.totalorder %s32, 0
      %p138 = por %p136, %p137
      %p139 = scmp.le.s32.totalorder 1, %s26
      %p140 = scmp.lt.s32.totalorder %s26, 3
      %p141 = pnand %p139, %p140
      %p142 = pneg %p141
      // Predicated region
      $region9: #{tpu_custom_call.1} parent=5 // pred_check
        _
      $region10: #{tpu_custom_call.1} parent=5 // pred_check_branch
        %144 = sbr.rel (%p141) target = $region12
      $region11: #{tpu_custom_call.1} parent=5 // pred_region
        %s145 = ssub.s32 %s26, 1
      $region12: #{tpu_custom_call.1} parent=5 // pred_fallthru
        _
      %p146 = scmp.lt.s32.totalorder %s26, 2
      // Predicated region
      $region13: #{tpu_custom_call.1} parent=5 // pred_check
        %p147 = pneg %p146
      $region14: #{tpu_custom_call.1} parent=5 // pred_check_branch
        %149 = sbr.rel (%p147) target = $region16
      $region15: #{tpu_custom_call.1} parent=5 // pred_region
        // Predicated region
        $region17: #{tpu_custom_call.1} parent=15 // pred_check
          %p150 = pneg %p67
        $region18: #{tpu_custom_call.1} parent=15 // pred_check_branch
          %152 = sbr.rel (%p150) target = $region20
        $region19: #{tpu_custom_call.1} parent=15 // pred_region
          %s153 = smul.u32 8, %s34
          %p154 = scmp.lt.s32.totalorder %s33, 1
          %s155 = scalar_select %p154, %s33, 1
          %p156 = scmp.lt.s32.totalorder %s153, 7
          %s157 = scalar_select %p156, %s153, 7
          %s158 = smul.addr %s155, 8
          %s159 = sadd.s32 %s157, %s158
          %s160 = smul.addr %s159, 4
          %s161 = scalar_lea.vmem %s2, %s160
          %s162 = smul.u32 8, %s34
        $region20: #{tpu_custom_call.1} parent=15 // pred_fallthru
          _
        // Predicated region
        $region21: #{tpu_custom_call.1} parent=15 // pred_check
          %p163 = pneg %p95
        $region22: #{tpu_custom_call.1} parent=15 // pred_check_branch
          %165 = sbr.rel (%p163) target = $region24
        $region23: #{tpu_custom_call.1} parent=15 // pred_region
          %p166 = scmp.lt.s32.totalorder %s33, 1
          %s167 = scalar_select %p166, %s33, 1
          %p168 = scmp.lt.s32.totalorder %s35, 0
          %s169 = scalar_select %p168, %s35, 0
          %s170 = sadd.s32 %s169, %s167
          %s171 = smul.addr %s170, 4
          %s172 = scalar_lea.vmem %s3, %s171
        $region24: #{tpu_custom_call.1} parent=15 // pred_fallthru
          _
      $region16: #{tpu_custom_call.1} parent=5 // pred_fallthru
        _
      %p173 = scmp.le.s32.totalorder 1, %s26
      %p174 = scmp.lt.s32.totalorder %s26, 3
      %p175 = pnand %p173, %p174
      %p176 = pneg %p175
      // Predicated region
      $region25: #{tpu_custom_call.1} parent=5 // pred_check
        _
      $region26: #{tpu_custom_call.1} parent=5 // pred_check_branch
        %178 = sbr.rel (%p175) target = $region28
      $region27: #{tpu_custom_call.1} parent=5 // pred_region
        %s179 = ssub.s32 %s26, 1
        %s180 = smul.u32 8, %s37
        %p181 = scmp.lt.s32.totalorder %s36, 1
        %s182 = scalar_select %p181, %s36, 1
        %p183 = scmp.lt.s32.totalorder %s180, 7
        %s184 = scalar_select %p183, %s180, 7
        %s185 = smul.addr %s182, 8
        %s186 = sadd.s32 %s184, %s185
        %s187 = smul.addr %s186, 4
        %s188 = scalar_lea.vmem %s2, %s187
        %p189 = pneg %p73
        %p190 = pneg %p70
        %p191 = scmp.lt.s32.totalorder %s36, 1
        %s192 = scalar_select %p191, %s36, 1
        %p193 = scmp.lt.s32.totalorder %s38, 0
        %s194 = scalar_select %p193, %s38, 0
        %s195 = sadd.s32 %s194, %s192
        %s196 = smul.addr %s195, 4
        %s197 = scalar_lea.vmem %s3, %s196
        %p198 = pneg %p101
        %p199 = pneg %p98
        %p200 = pneg %p131
        %p201 = pneg %p128
        %s202 = sand.u32 %s118, 1
        %s203 = scalar_lea.sflag [#allocation6], %s202
        %s204 = sand.u32 %s118, 1
        %s205 = smul.addr %s204, 16
        %s206 = scalar_lea.vmem [#allocation5], %s205
        %s207 = smul.u32 8, %s37
        %p208 = scmp.lt.s32.totalorder %s36, 1
        %s209 = scalar_select %p208, %s36, 1
        %p210 = scmp.lt.s32.totalorder %s207, 7
        %s211 = scalar_select %p210, %s207, 7
        %s212 = smul.addr %s209, 8
        %s213 = sadd.s32 %s211, %s212
        %s214 = smul.addr %s213, 4
        %s215 = scalar_lea.vmem %s2, %s214
        %s216 = smul.u32 8, %s37
        %p217 = scmp.lt.s32.totalorder %s36, 1
        %s218 = scalar_select %p217, %s36, 1
        %p219 = scmp.lt.s32.totalorder %s38, 0
        %s220 = scalar_select %p219, %s38, 0
        %s221 = sadd.s32 %s220, %s218
        %s222 = smul.addr %s221, 4
        %s223 = scalar_lea.vmem %s3, %s222
        %s224 = smul.u32 2, %s37
        %v228 = vld [vmem:[%s215] sm:$0xf]
        %v229 = vld [vmem:[%s215 + $0x4] sm:$0xf]
        %v230 = vld [vmem:[%s215 + $0x8] sm:$0xf]
        %v231 = vld [vmem:[%s215 + $0xc] sm:$0xf]
        %v232 = vld [vmem:[%s215 + $0x10] sm:$0xf]
        %v233 = vld [vmem:[%s215 + $0x14] sm:$0xf]
        %v234 = vld [vmem:[%s215 + $0x18] sm:$0xf]
        %v235 = vld [vmem:[%s215 + $0x1c] sm:$0xf]
        %v236 = vld [vmem:[%s223] sm:$0x7]
        %v245 = vunpack.c.l.b16 %v228
        %v246 = vunpack.c.l.b16 %v229
        %v247 = vunpack.c.l.b16 %v230
        %v248 = vunpack.c.l.b16 %v231
        %v249 = vunpack.c.l.b16 %v232
        %v250 = vunpack.c.l.b16 %v233
        %v251 = vunpack.c.l.b16 %v234
        %v252 = vunpack.c.l.b16 %v235
        %v253 = vpack.c.b16 %v246, %v245
        %v254 = vpack.c.b16 %v248, %v247
        %v255 = vpack.c.b16 %v250, %v249
        %v256 = vpack.c.b16 %v252, %v251
        %vm257 = vcmask 39936
        %v259 = vsel %vm257, %v253, 0
        %v262 = vsel %vm257, %v254, 0
        %v265 = vsel %vm257, %v255, 0
        %v268 = vsel %vm257, %v256, 0
        %vm270 = vcmask 1041408
        %vm271 = vcmask 1042432
        %v272 = vsel %vm270, 4294967295, 65535
        %v273 = vsel %vm271, %v272, 0
        %v275 = vand.u32 %v236, %v273
        %277 = vmatpush.bf16.msra.mxu0 0
        %278 = vmatpush.bf16.msra.mxu0 0
        %279 = vmatpush.bf16.msra.mxu0 0
        %280 = vmatpush.bf16.msra.mxu0 0
        %281 = vmatpush.bf16.msra.mxu0 0
        %282 = vmatpush.bf16.msra.mxu0 0
        %283 = vmatpush.bf16.msra.mxu0 0
        %284 = vmatpush.bf16.msra.mxu0 %v275
        %285 = vmatmul.bf16.gmra.mxu0 %v259
        %v286 = vpop.f32.mrf.mxu0
        %v287 = vadd.f32 0.0, %v286
        %v288 = vpop.f32.mrf.mxu0
        %v289 = vadd.f32 0.0, %v288
        %290 = vmatmul.bf16.gmra.mxu0 %v262
        %v291 = vpop.f32.mrf.mxu0
        %v292 = vadd.f32 0.0, %v291
        %v293 = vpop.f32.mrf.mxu0
        %v294 = vadd.f32 0.0, %v293
        %295 = vmatmul.bf16.gmra.mxu0 %v265
        %v296 = vpop.f32.mrf.mxu0
        %v297 = vadd.f32 0.0, %v296
        %v298 = vpop.f32.mrf.mxu0
        %v299 = vadd.f32 0.0, %v298
        %300 = vmatmul.bf16.gmra.mxu0 %v268
        %v301 = vpop.f32.mrf.mxu0
        %v302 = vadd.f32 0.0, %v301
        %v303 = vpop.f32.mrf.mxu0
        %v304 = vadd.f32 0.0, %v303
        %305 = vdwg.mxu0
        %vm306 = vcmp.gt.f32.partialorder %v287, 0.5
        %vm307 = vcmp.gt.f32.partialorder %v289, 0.5
        %vm308 = vcmp.gt.f32.partialorder %v292, 0.5
        %vm309 = vcmp.gt.f32.partialorder %v294, 0.5
        %vm310 = vcmp.gt.f32.partialorder %v297, 0.5
        %vm311 = vcmp.gt.f32.partialorder %v299, 0.5
        %vm312 = vcmp.gt.f32.partialorder %v302, 0.5
        %vm313 = vcmp.gt.f32.partialorder %v304, 0.5
        %s314 = smul.u32 %s37, 64
        %v315 = vlaneseq
        %v316 = vshrl.u32 %v315, 7
        %v317 = vadd.s32 %v316, 8
        %v318 = vadd.s32 %v316, 16
        %v319 = vadd.s32 %v316, 24
        %v320 = vadd.s32 %v316, 32
        %v321 = vadd.s32 %v316, 40
        %v322 = vadd.s32 %v316, 48
        %v323 = vadd.s32 %v316, 56
        %v324 = vstv %s314
        %v325 = vadd.s32 %v324, %v316
        %v326 = vadd.s32 %v324, %v317
        %v327 = vadd.s32 %v324, %v318
        %v328 = vadd.s32 %v324, %v319
        %v329 = vadd.s32 %v324, %v320
        %v330 = vadd.s32 %v324, %v321
        %v331 = vadd.s32 %v324, %v322
        %v332 = vadd.s32 %v324, %v323
        %s333 = smul.u32 %s38, 128
        %v334 = vlaneseq
        %v335 = vand.u32 %v334, 127
        %v336 = vstv %s333
        %v337 = vadd.s32 %v336, %v335
        %s338 = sld [smem:[#allocation3 + %s36]]
        %v339 = vstv %s338
        %vm340 = vcmp.ge.s32.totalorder %v325, %v339
        %vm341 = vcmp.ge.s32.totalorder %v326, %v339
        %vm342 = vcmp.ge.s32.totalorder %v327, %v339
        %vm343 = vcmp.ge.s32.totalorder %v328, %v339
        %vm344 = vcmp.ge.s32.totalorder %v329, %v339
        %vm345 = vcmp.ge.s32.totalorder %v330, %v339
        %vm346 = vcmp.ge.s32.totalorder %v331, %v339
        %vm347 = vcmp.ge.s32.totalorder %v332, %v339
        %v348 = vsel %vm340, %v325, 1073741824
        %v349 = vsel %vm341, %v326, 1073741824
        %v350 = vsel %vm342, %v327, 1073741824
        %v351 = vsel %vm343, %v328, 1073741824
        %v352 = vsel %vm344, %v329, 1073741824
        %v353 = vsel %vm345, %v330, 1073741824
        %v354 = vsel %vm346, %v331, 1073741824
        %v355 = vsel %vm347, %v332, 1073741824
        %vm356 = vcmp.le.s32.totalorder %v337, %v348
        %vm357 = vcmp.le.s32.totalorder %v337, %v349
        %vm358 = vcmp.le.s32.totalorder %v337, %v350
        %vm359 = vcmp.le.s32.totalorder %v337, %v351
        %vm360 = vcmp.le.s32.totalorder %v337, %v352
        %vm361 = vcmp.le.s32.totalorder %v337, %v353
        %vm362 = vcmp.le.s32.totalorder %v337, %v354
        %vm363 = vcmp.le.s32.totalorder %v337, %v355
        %vm364 = vmand %vm306, %vm356
        %vm365 = vmand %vm307, %vm357
        %vm366 = vmand %vm308, %vm358
        %vm367 = vmand %vm309, %vm359
        %vm368 = vmand %vm310, %vm360
        %vm369 = vmand %vm311, %vm361
        %vm370 = vmand %vm312, %vm362
        %vm371 = vmand %vm313, %vm363
        %vm372 = vcmp.lt.s32.totalorder %v325, %v339
        %vm373 = vcmp.lt.s32.totalorder %v326, %v339
        %vm374 = vcmp.lt.s32.totalorder %v327, %v339
        %vm375 = vcmp.lt.s32.totalorder %v328, %v339
        %vm376 = vcmp.lt.s32.totalorder %v329, %v339
        %vm377 = vcmp.lt.s32.totalorder %v330, %v339
        %vm378 = vcmp.lt.s32.totalorder %v331, %v339
        %vm379 = vcmp.lt.s32.totalorder %v332, %v339
        %v380 = vsel %vm372, %v339, 4294967295
        %v381 = vsel %vm373, %v339, 4294967295
        %v382 = vsel %vm374, %v339, 4294967295
        %v383 = vsel %vm375, %v339, 4294967295
        %v384 = vsel %vm376, %v339, 4294967295
        %v385 = vsel %vm377, %v339, 4294967295
        %v386 = vsel %vm378, %v339, 4294967295
        %v387 = vsel %vm379, %v339, 4294967295
        %vm388 = vcmp.lt.s32.totalorder %v337, %v380
        %vm389 = vcmp.lt.s32.totalorder %v337, %v381
        %vm390 = vcmp.lt.s32.totalorder %v337, %v382
        %vm391 = vcmp.lt.s32.totalorder %v337, %v383
        %vm392 = vcmp.lt.s32.totalorder %v337, %v384
        %vm393 = vcmp.lt.s32.totalorder %v337, %v385
        %vm394 = vcmp.lt.s32.totalorder %v337, %v386
        %vm395 = vcmp.lt.s32.totalorder %v337, %v387
        %vm396 = vmor %vm364, %vm388
        %vm397 = vmor %vm365, %vm389
        %vm398 = vmor %vm366, %vm390
        %vm399 = vmor %vm367, %vm391
        %vm400 = vmor %vm368, %vm392
        %vm401 = vmor %vm369, %vm393
        %vm402 = vmor %vm370, %vm394
        %vm403 = vmor %vm371, %vm395
        %s404 = sld [smem:[#allocation4 + %s36]]
        %v405 = vstv %s404
        %vm406 = vcmp.lt.s32.totalorder %v325, %v405
        %vm407 = vcmp.lt.s32.totalorder %v326, %v405
        %vm408 = vcmp.lt.s32.totalorder %v327, %v405
        %vm409 = vcmp.lt.s32.totalorder %v328, %v405
        %vm410 = vcmp.lt.s32.totalorder %v329, %v405
        %vm411 = vcmp.lt.s32.totalorder %v330, %v405
        %vm412 = vcmp.lt.s32.totalorder %v331, %v405
        %vm413 = vcmp.lt.s32.totalorder %v332, %v405
        %vm414 = vmand %vm340, %vm406
        %vm415 = vmand %vm341, %vm407
        %vm416 = vmand %vm342, %vm408
        %vm417 = vmand %vm343, %vm409
        %vm418 = vmand %vm344, %vm410
        %vm419 = vmand %vm345, %vm411
        %vm420 = vmand %vm346, %vm412
        %vm421 = vmand %vm347, %vm413
        %v422 = vsel %vm414, %v339, 4294967295
        %v423 = vsel %vm415, %v339, 4294967295
        %v424 = vsel %vm416, %v339, 4294967295
        %v425 = vsel %vm417, %v339, 4294967295
        %v426 = vsel %vm418, %v339, 4294967295
        %v427 = vsel %vm419, %v339, 4294967295
        %v428 = vsel %vm420, %v339, 4294967295
        %v429 = vsel %vm421, %v339, 4294967295
        %vm430 = vcmp.lt.s32.totalorder %v337, %v422
        %vm431 = vcmp.lt.s32.totalorder %v337, %v423
        %vm432 = vcmp.lt.s32.totalorder %v337, %v424
        %vm433 = vcmp.lt.s32.totalorder %v337, %v425
        %vm434 = vcmp.lt.s32.totalorder %v337, %v426
        %vm435 = vcmp.lt.s32.totalorder %v337, %v427
        %vm436 = vcmp.lt.s32.totalorder %v337, %v428
        %vm437 = vcmp.lt.s32.totalorder %v337, %v429
        %vm438 = vmor %vm396, %vm430
        %vm439 = vmor %vm397, %vm431
        %vm440 = vmor %vm398, %vm432
        %vm441 = vmor %vm399, %vm433
        %vm442 = vmor %vm400, %vm434
        %vm443 = vmor %vm401, %vm435
        %vm444 = vmor %vm402, %vm436
        %vm445 = vmor %vm403, %vm437
        %vm446 = vmxor %vm438, 1
        %vm447 = vmxor %vm439, 1
        %vm448 = vmxor %vm440, 1
        %vm449 = vmxor %vm441, 1
        %vm450 = vmxor %vm442, 1
        %vm451 = vmxor %vm443, 1
        %vm452 = vmxor %vm444, 1
        %vm453 = vmxor %vm445, 1
        %vm454 = vmpackc.low %vm447, %vm446
        %vm455 = vmpackc.low %vm449, %vm448
        %v456 = vsel %vm454, 16711935, 0
        %v457 = vsel %vm455, 16711935, 0
        %v458 = vpack.c.b8 %v457, %v456
        %vm459 = vnez %v458
        %vm460 = vmpackc.low %vm451, %vm450
        %vm461 = vmpackc.low %vm453, %vm452
        %v462 = vsel %vm460, 16711935, 0
        %v463 = vsel %vm461, 16711935, 0
        %v464 = vpack.c.b8 %v463, %v462
        %vm465 = vnez %v464
        %v466 = vsel %vm459, 16843009, 0
        %v467 = vsel %vm465, 16843009, 0
        %468 = vst [vmem:[%s206] sm:$0xff] %v466
        %469 = vst [vmem:[%s206 + $0x8] sm:$0xff] %v467
        %s470 = sand.u32 %s118, 1
        %s471 = scalar_lea.sflag [#allocation6], %s470
        %s472 = sand.u32 %s118, 1
        %s473 = smul.addr %s472, 16
        %s474 = scalar_lea.vmem [#allocation5], %s473
        // Predicated region
        $region29: #{tpu_custom_call.1} parent=27 // pred_check
          %p475 = pneg %p128
        $region30: #{tpu_custom_call.1} parent=27 // pred_check_branch
          %477 = sbr.rel (%p475) target = $region32
        $region31: #{tpu_custom_call.1} parent=27 // pred_region
          %s478 = smul.u32 2, %s37
          %480 = vsyncadd %s471, 0
          %s481 = sadd.s32 %s38, %s478
          %s482 = smul.addr %s36, 2
          %s483 = sadd.s32 %s481, %s482
          %s484 = smul.addr %s483, 8
          %s485 = scalar_lea.hbm %s4, %s484
          %s486 = sshll.u32 %s474, 4
          %s487 = int_to_ptr.vmem [resolvable:$true] %s486
          %s488 = sshll.u32 %s485, 4
          %s489 = int_to_ptr.hbm [resolvable:$true] %s488
          %494 = dma.vmem_to_hbm [thread:$0]  %s487, 256, %s489, %s471, 128, 128, 8
        $region32: #{tpu_custom_call.1} parent=27 // pred_fallthru
          _
      $region28: #{tpu_custom_call.1} parent=5 // pred_fallthru
        _
      %p495 = scmp.le.s32.totalorder 2, %s26
      // Predicated region
      $region33: #{tpu_custom_call.1} parent=5 // pred_check
        %p496 = pneg %p495
      $region34: #{tpu_custom_call.1} parent=5 // pred_check_branch
        %498 = sbr.rel (%p496) target = $region36
      $region35: #{tpu_custom_call.1} parent=5 // pred_region
        %s499 = ssub.s32 %s26, 2
        // Predicated region
        $region37: #{tpu_custom_call.1} parent=35 // pred_check
          %p500 = pneg %p134
        $region38: #{tpu_custom_call.1} parent=35 // pred_check_branch
          %502 = sbr.rel (%p500) target = $region40
        $region39: #{tpu_custom_call.1} parent=35 // pred_region
          %s503 = sand.u32 %s119, 1
          %s504 = scalar_lea.sflag [#allocation6], %s503
          %s505 = sand.u32 %s119, 1
          %s506 = smul.addr %s505, 16
          %s507 = scalar_lea.vmem [#allocation5], %s506
          %509 = dma.done %s504, 256
        $region40: #{tpu_custom_call.1} parent=35 // pred_fallthru
          _
      $region36: #{tpu_custom_call.1} parent=5 // pred_fallthru
        _
    $region6: #{tpu_custom_call.1} parent=1 // loop_footer
      %s30 = sadd.s32 1, %s26
    $region7: #{tpu_custom_call.1} parent=1 // loop_footer_branch
      %25 = sbr.rel target = $region3
    $region8: #{tpu_custom_call.1} parent=1 // loop_exit
      _
    %510 = vsyncpa [#allocation6], 1
    %s511 = scalar_lea.sflag [#allocation6], 1
    %512 = vsyncpa %s511, 1

</llo_original>
